<compile_context>
chip_gen: v5e
topology: v5e:2x2
jax: 0.10.0
libtpu: 0.0.40
codegen_flags: <defaults>
</compile_context>

<pallas_src>
import jax
import jax.numpy as jnp
from jax.experimental import pallas as pl
from jax.experimental.pallas import tpu as pltpu


def _round_up(x, m):
    return ((x + m - 1) // m) * m


def _gemm_bn_relu_kernel(p_ref, w_ref, scale_ref, shift_ref, o_ref, acc_ref):
    """Fused GEMM + folded-BatchNorm + ReLU.

    Grid = (M tiles, COUT tiles, K tiles); K is the reduction ("arbitrary") axis.
      p_ref:     (TM, TK)  im2col patch tile (bf16/f32)
      w_ref:     (TK, TN)  packed weight tile (bf16/f32)
      scale_ref: (1, TN)   gamma / sqrt(running_var + eps)       (f32)
      shift_ref: (1, TN)   beta - running_mean * scale           (f32)
      o_ref:     (TM, TN)  output tile (f32), lane-dense (TN % 128 == 0)
      acc_ref:   (TM, TN)  f32 VMEM accumulator, lives across the K axis
    """
    k = pl.program_id(2)

    @pl.when(k == 0)
    def _init():
        acc_ref[...] = jnp.zeros_like(acc_ref)

    acc_ref[...] += jnp.dot(p_ref[...], w_ref[...],
                            preferred_element_type=jnp.float32)

    @pl.when(k == pl.num_programs(2) - 1)
    def _finalize():
        y = acc_ref[...] * scale_ref[...] + shift_ref[...]   # folded BN
        o_ref[...] = jnp.maximum(y, 0.0).astype(o_ref.dtype)  # ReLU


def incept_conv(x_nchw, weight_oihw, gamma, beta, running_mean, running_var,
                *, stride, padding, eps=1e-3, compute_dtype=jnp.bfloat16):
    """Forward pass of InceptConv.  Input/output are NCHW float32 (PyTorch convention)."""
    N, CIN, H, W = x_nchw.shape
    COUT, CIN_w, KH, KW = weight_oihw.shape
    assert CIN == CIN_w
    SH, SW = (stride, stride) if isinstance(stride, int) else tuple(stride)
    PH, PW = (padding, padding) if isinstance(padding, int) else tuple(padding)

    OH = (H + 2 * PH - KH) // SH + 1
    OW = (W + 2 * PW - KW) // SW + 1

    # ---- wrapper glue (plain JAX, fused by XLA): layout, im2col packing, BN folding ----
    # NCHW -> NHWC (channels on the 128-lane axis), zero-pad the conv halo.
    x_nhwc = jnp.transpose(x_nchw, (0, 2, 3, 1))
    x_pad = jnp.pad(x_nhwc, ((0, 0), (PH, PH), (PW, PW), (0, 0)))

    # im2col: pack every (kh, kw) tap into the contraction axis.  Tap order is
    # kh-major, then kw, then cin, matching the HWIO weight flatten below.
    taps = []
    for kh in range(KH):
        for kw in range(KW):
            taps.append(x_pad[:, kh:kh + (OH - 1) * SH + 1:SH,
                              kw:kw + (OW - 1) * SW + 1:SW, :])
    K = KH * KW * CIN
    M = N * OH * OW
    patches = jnp.concatenate(taps, axis=-1).reshape(M, K)      # (M, KH*KW*CIN)

    # Weights OIHW -> HWIO -> (KH*KW*CIN, COUT).
    w_packed = jnp.transpose(weight_oihw, (2, 3, 1, 0)).reshape(K, COUT)

    # Eval-mode BatchNorm folded into a per-channel scale/shift epilogue.
    scale = (gamma / jnp.sqrt(running_var + eps)).astype(jnp.float32)
    shift = (beta - running_mean * scale).astype(jnp.float32)

    # ---- tiling: pad M / K / COUT to MXU- and lane-friendly multiples of 128 ----
    TM = min(512, _round_up(M, 128))
    TN = min(256, _round_up(COUT, 128))
    TK = min(512, _round_up(K, 128))
    M_pad = _round_up(M, TM)
    N_pad = _round_up(COUT, TN)
    K_pad = _round_up(K, TK)

    patches = jnp.pad(patches, ((0, M_pad - M), (0, K_pad - K))).astype(compute_dtype)
    w_packed = jnp.pad(w_packed, ((0, K_pad - K), (0, N_pad - COUT))).astype(compute_dtype)
    scale = jnp.pad(scale, (0, N_pad - COUT)).reshape(1, N_pad)
    shift = jnp.pad(shift, (0, N_pad - COUT)).reshape(1, N_pad)

    grid = (M_pad // TM, N_pad // TN, K_pad // TK)

    out = pl.pallas_call(
        _gemm_bn_relu_kernel,
        out_shape=jax.ShapeDtypeStruct((M_pad, N_pad), jnp.float32),
        grid=grid,
        in_specs=[
            pl.BlockSpec((TM, TK), lambda i, j, k: (i, k)),   # patches
            pl.BlockSpec((TK, TN), lambda i, j, k: (k, j)),   # weights
            pl.BlockSpec((1, TN), lambda i, j, k: (0, j)),    # BN scale
            pl.BlockSpec((1, TN), lambda i, j, k: (0, j)),    # BN shift
        ],
        out_specs=pl.BlockSpec((TM, TN), lambda i, j, k: (i, j)),
        scratch_shapes=[pltpu.VMEM((TM, TN), jnp.float32)],
        compiler_params=pltpu.CompilerParams(
            dimension_semantics=("parallel", "parallel", "arbitrary")),
    )(patches, w_packed, scale, shift)

    # Slice off padding, back to NCHW to match the PyTorch module's output convention.
    out = out[:M, :COUT].reshape(N, OH, OW, COUT)
    return jnp.transpose(out, (0, 3, 1, 2))


def _reference(x_nchw, weight_oihw, gamma, beta, running_mean, running_var,
               *, stride, padding, eps=1e-3):
    y = jax.lax.conv_general_dilated(
        x_nchw, weight_oihw, window_strides=(stride, stride),
        padding=[(padding, padding), (padding, padding)],
        dimension_numbers=("NCHW", "OIHW", "NCHW"),
        precision=jax.lax.Precision.HIGHEST)
    g = gamma[None, :, None, None]
    b = beta[None, :, None, None]
    m = running_mean[None, :, None, None]
    v = running_var[None, :, None, None]
    y = g * (y - m) / jnp.sqrt(v + eps) + b
    return jnp.maximum(y, 0.0)


if __name__ == "__main__":
    # Small shapes consistent with the module: N=2, Cin=4, H=W=16, Cout=8, 3x3, stride=2, pad=1.
    N, CIN, H, W = 2, 4, 16, 16
    COUT, KSZ, STRIDE, PAD = 8, 3, 2, 1

    key = jax.random.PRNGKey(0)
    kx, kw, kg, kb, km, kv = jax.random.split(key, 6)

    x = jax.random.normal(kx, (N, CIN, H, W), dtype=jnp.float32)
    weight = 0.1 * jax.random.normal(kw, (COUT, CIN, KSZ, KSZ), dtype=jnp.float32)  # OIHW
    gamma = 1.0 + 0.1 * jax.random.normal(kg, (COUT,), dtype=jnp.float32)           # bn.weight
    beta = 0.1 * jax.random.normal(kb, (COUT,), dtype=jnp.float32)                  # bn.bias
    running_mean = 0.1 * jax.random.normal(km, (COUT,), dtype=jnp.float32)
    running_var = 0.5 + jax.random.uniform(kv, (COUT,), dtype=jnp.float32)          # > 0

    ref = _reference(x, weight, gamma, beta, running_mean, running_var,
                     stride=STRIDE, padding=PAD, eps=1e-3)
    OH = (H + 2 * PAD - KSZ) // STRIDE + 1
    OW = (W + 2 * PAD - KSZ) // STRIDE + 1

    # f32 compute path (tolerance kept generous to be robust to MXU f32 precision modes;
    # any layout/indexing/BN bug would produce O(0.1..1) errors).
    out_f32 = incept_conv(x, weight, gamma, beta, running_mean, running_var,
                          stride=STRIDE, padding=PAD, eps=1e-3,
                          compute_dtype=jnp.float32)
    out_f32 = jax.block_until_ready(out_f32)
    assert out_f32.shape == ref.shape == (N, COUT, OH, OW)
    assert jnp.allclose(out_f32, ref, rtol=1e-2, atol=1e-2), "f32 path mismatch vs reference"

    # Default bf16 fast path (MXU-native inputs, f32 accumulation) -- looser tolerance.
    out_bf16 = incept_conv(x, weight, gamma, beta, running_mean, running_var,
                           stride=STRIDE, padding=PAD, eps=1e-3)
    out_bf16 = jax.block_until_ready(out_bf16)
    assert out_bf16.shape == ref.shape
    assert jnp.allclose(out_bf16, ref, rtol=5e-2, atol=5e-2), "bf16 path mismatch vs reference"

    print("KERNEL_OK")
</pallas_src>

<mosaic_0001>
module attributes {stable_mosaic.version = 11 : i64} {
  func.func @_gemm_bn_relu_kernel(%arg0: i32, %arg1: i32, %arg2: i32, %arg3: memref<128x128xf32, #tpu.memory_space<vmem>>, %arg4: memref<128x128xf32, #tpu.memory_space<vmem>>, %arg5: memref<1x128xf32, #tpu.memory_space<vmem>>, %arg6: memref<1x128xf32, #tpu.memory_space<vmem>>, %arg7: memref<128x128xf32, #tpu.memory_space<vmem>>, %arg8: memref<128x128xf32, #tpu.memory_space<vmem>>) attributes {dimension_semantics = [#tpu.dimension_semantics<parallel>, #tpu.dimension_semantics<parallel>, #tpu.dimension_semantics<arbitrary>], iteration_bounds = array<i64: 1, 1, 1>, scalar_prefetch = 0 : i64, scratch_operands = 1 : i64, tpu.core_type = #tpu.core_type<tc>, window_params = [{transform_indices = @transform_0, window_bounds = array<i64: 128, 128>}, {transform_indices = @transform_1, window_bounds = array<i64: 128, 128>}, {transform_indices = @transform_2, window_bounds = array<i64: 1, 128>}, {transform_indices = @transform_3, window_bounds = array<i64: 1, 128>}, {transform_indices = @transform_4, window_bounds = array<i64: 128, 128>}]} {
    %c0_i32 = arith.constant 0 : i32
    %0 = arith.cmpi eq, %arg2, %c0_i32 : i32
    %1 = arith.extui %0 : i1 to i32
    %c0_i32_0 = arith.constant 0 : i32
    %2 = arith.cmpi ne, %1, %c0_i32_0 : i32
    scf.if %2 {
      %cst_10 = arith.constant 0.000000e+00 : f32
      %12 = vector.broadcast %cst_10 : f32 to vector<128x128xf32>
      %c0_11 = arith.constant 0 : index
      %c0_12 = arith.constant 0 : index
      %13 = vector.load %arg8[%c0_11, %c0_12] : memref<128x128xf32, #tpu.memory_space<vmem>>, vector<128x128xf32>
      tpu.vector_store %arg8[%c0_11, %c0_12], %12 {strides = array<i32>} : memref<128x128xf32, #tpu.memory_space<vmem>>, vector<128x128xf32>,
    } else {
    }
    %c0 = arith.constant 0 : index
    %c0_1 = arith.constant 0 : index
    %3 = vector.load %arg8[%c0, %c0_1] : memref<128x128xf32, #tpu.memory_space<vmem>>, vector<128x128xf32>
    %c0_2 = arith.constant 0 : index
    %c0_3 = arith.constant 0 : index
    %4 = vector.load %arg3[%c0_2, %c0_3] : memref<128x128xf32, #tpu.memory_space<vmem>>, vector<128x128xf32>
    %c0_4 = arith.constant 0 : index
    %c0_5 = arith.constant 0 : index
    %5 = vector.load %arg4[%c0_4, %c0_5] : memref<128x128xf32, #tpu.memory_space<vmem>>, vector<128x128xf32>
    %cst = arith.constant dense<0.000000e+00> : vector<128x128xf32>
    %6 = tpu.matmul %4, %5, %cst {dimension_numbers = #tpu.dot_dimension_numbers<[1], [0], [0], [1], [0, 0, 1, 1], [], []>} : vector<128x128xf32>, vector<128x128xf32>, vector<128x128xf32> -> vector<128x128xf32>
    %7 = arith.addf %3, %6 : vector<128x128xf32>
    %c0_6 = arith.constant 0 : index
    %c0_7 = arith.constant 0 : index
    %8 = vector.load %arg8[%c0_6, %c0_7] : memref<128x128xf32, #tpu.memory_space<vmem>>, vector<128x128xf32>
    tpu.vector_store %arg8[%c0_6, %c0_7], %7 {strides = array<i32>} : memref<128x128xf32, #tpu.memory_space<vmem>>, vector<128x128xf32>,
    %c0_i32_8 = arith.constant 0 : i32
    %9 = arith.cmpi eq, %arg2, %c0_i32_8 : i32
    %10 = arith.extui %9 : i1 to i32
    %c0_i32_9 = arith.constant 0 : i32
    %11 = arith.cmpi ne, %10, %c0_i32_9 : i32
    scf.if %11 {
      %c0_10 = arith.constant 0 : index
      %c0_11 = arith.constant 0 : index
      %12 = vector.load %arg8[%c0_10, %c0_11] : memref<128x128xf32, #tpu.memory_space<vmem>>, vector<128x128xf32>
      %c0_12 = arith.constant 0 : index
      %c0_13 = arith.constant 0 : index
      %13 = vector.load %arg5[%c0_12, %c0_13] : memref<1x128xf32, #tpu.memory_space<vmem>>, vector<1x128xf32>
      %14 = vector.broadcast %13 : vector<1x128xf32> to vector<128x128xf32>
      %15 = arith.mulf %12, %14 : vector<128x128xf32>
      %c0_14 = arith.constant 0 : index
      %c0_15 = arith.constant 0 : index
      %16 = vector.load %arg6[%c0_14, %c0_15] : memref<1x128xf32, #tpu.memory_space<vmem>>, vector<1x128xf32>
      %17 = vector.broadcast %16 : vector<1x128xf32> to vector<128x128xf32>
      %18 = arith.addf %15, %17 : vector<128x128xf32>
      %cst_16 = arith.constant 0.000000e+00 : f32
      %19 = vector.broadcast %cst_16 : f32 to vector<128x128xf32>
      %20 = arith.maximumf %18, %19 : vector<128x128xf32>
      %c0_17 = arith.constant 0 : index
      %c0_18 = arith.constant 0 : index
      %21 = vector.load %arg7[%c0_17, %c0_18] : memref<128x128xf32, #tpu.memory_space<vmem>>, vector<128x128xf32>
      tpu.vector_store %arg7[%c0_17, %c0_18], %20 {strides = array<i32>} : memref<128x128xf32, #tpu.memory_space<vmem>>, vector<128x128xf32>,
    } else {
    }
    return
  }
  func.func @transform_0(%arg0: i32, %arg1: i32, %arg2: i32) -> (i32, i32) {
    %c0_i32 = arith.constant 0 : i32
    return %arg0, %arg2 : i32, i32
  }
  func.func @transform_1(%arg0: i32, %arg1: i32, %arg2: i32) -> (i32, i32) {
    %c0_i32 = arith.constant 0 : i32
    return %arg2, %arg1 : i32, i32
  }
  func.func @transform_2(%arg0: i32, %arg1: i32, %arg2: i32) -> (i32, i32) {
    %c0_i32 = arith.constant 0 : i32
    %c0_i32_0 = arith.constant 0 : i32
    return %c0_i32, %arg1 : i32, i32
  }
  func.func @transform_3(%arg0: i32, %arg1: i32, %arg2: i32) -> (i32, i32) {
    %c0_i32 = arith.constant 0 : i32
    %c0_i32_0 = arith.constant 0 : i32
    return %c0_i32, %arg1 : i32, i32
  }
  func.func @transform_4(%arg0: i32, %arg1: i32, %arg2: i32) -> (i32, i32) {
    %c0_i32 = arith.constant 0 : i32
    return %arg0, %arg1 : i32, i32
  }
}

</mosaic_0001>

<llo_original>
// kernel: tpu_custom_call.1
$region0: #{tpu_custom_call.1}
  #allocation0 [shape = 'u32[]', space=smem, size = 0x4, offset = 0x4, fixed_abs, tag = 'smem constant byte address 0x4 - core index']
  #allocation1 [shape = 'u32[72,128]{1,0:T(1,128)}', space=vmem, size = 0x9000, scoped, tag = 'internal scratch']
  #allocation2 [shape = 'f32[128,128]{1,0:T(8,128)}', space=vmem, size = 0x10000, scoped, tag = 'scratch operand']
  %s0 = inlined_call_operand.hbm [shape: f32[128,128], index: 0, kind: input, shape index: {}]
  %s1 = inlined_call_operand.hbm [shape: f32[128,128], index: 1, kind: input, shape index: {}]
  %s2 = inlined_call_operand.vmem [shape: f32[1,128], index: 2, kind: input, shape index: {}]
  %s3 = inlined_call_operand.vmem [shape: f32[1,128], index: 3, kind: input, shape index: {}]
  %s4 = inlined_call_operand.hbm [shape: f32[128,128], index: 4, kind: output, shape index: {}]
  %s5 = sld [smem:[#allocation0]]
  $region42: #{tpu_custom_call.1} parent=0
    _
  %s7 = ssub.s32 1, %s5
  %s8 = scalar_select 0, %s7, %s5
  $region1: #{tpu_custom_call.1} parent=0
    #allocation3 [shape = 'u8[65536]{0}', space=vmem, size = 0x10000, scoped, tag = 'input window, operand 0, single buffered']
    #allocation4 [shape = 's32[1]{0}', space=sflag, size = 0x4, scoped, tag = 'scoped memory for tpu_custom_call.1']
    #allocation5 [shape = 's32[1]{0}', space=sflag, size = 0x4, scoped, tag = 'scoped memory for tpu_custom_call.1']
    #allocation6 [shape = 'u8[65536]{0}', space=vmem, size = 0x10000, scoped, tag = 'input window, operand 1, single buffered']
    #allocation7 [shape = 's32[1]{0}', space=sflag, size = 0x4, scoped, tag = 'scoped memory for tpu_custom_call.1']
    #allocation8 [shape = 'u8[65536]{0}', space=vmem, size = 0x10000, scoped, tag = 'output window, operand 0, single buffered']
    %9 = vsyncpa [#allocation4], 0
    %10 = vsyncpa [#allocation7], 0
    %11 = vsyncpa [#allocation5], 0
    // Predicated region
    $region2: #{tpu_custom_call.1} parent=1 // pred_check
      _
    $region3: #{tpu_custom_call.1} parent=1 // pred_check_branch
      %13 = sbr.rel (0) target = $region5
    $region4: #{tpu_custom_call.1} parent=1 // pred_region
      %15 = vsyncadd [#allocation4], 0
      %s16 = sshll.u32 %s0, 4
      %s17 = int_to_ptr.hbm [resolvable:$true] %s16
      %s18 = sshll.u32 [#allocation3], 4
      %s19 = int_to_ptr.vmem [resolvable:$true] %s18
      %24 = dma.hbm_to_vmem [thread:$0]  %s17, 2048, %s19, [#allocation4], 128, 128, 8
    $region5: #{tpu_custom_call.1} parent=1 // pred_fallthru
      _
    // Predicated region
    $region6: #{tpu_custom_call.1} parent=1 // pred_check
      _
    $region7: #{tpu_custom_call.1} parent=1 // pred_check_branch
      %26 = sbr.rel (0) target = $region9
    $region8: #{tpu_custom_call.1} parent=1 // pred_region
      %28 = vsyncadd [#allocation7], 0
      %s29 = sshll.u32 %s1, 4
      %s30 = int_to_ptr.hbm [resolvable:$true] %s29
      %s31 = sshll.u32 [#allocation6], 4
      %s32 = int_to_ptr.vmem [resolvable:$true] %s31
      %37 = dma.hbm_to_vmem [thread:$0]  %s30, 2048, %s32, [#allocation7], 128, 128, 8
    $region9: #{tpu_custom_call.1} parent=1 // pred_fallthru
      _
    // Predicated region
    $region10: #{tpu_custom_call.1} parent=1 // pred_check
      _
    $region11: #{tpu_custom_call.1} parent=1 // pred_check_branch
      %39 = sbr.rel (0) target = $region13
    $region12: #{tpu_custom_call.1} parent=1 // pred_region
      _
    $region13: #{tpu_custom_call.1} parent=1 // pred_fallthru
      _
    // Predicated region
    $region14: #{tpu_custom_call.1} parent=1 // pred_check
      _
    $region15: #{tpu_custom_call.1} parent=1 // pred_check_branch
      %41 = sbr.rel (0) target = $region17
    $region16: #{tpu_custom_call.1} parent=1 // pred_region
      _
    $region17: #{tpu_custom_call.1} parent=1 // pred_fallthru
      _
    // Predicated region
    $region18: #{tpu_custom_call.1} parent=1 // pred_check
      _
    $region19: #{tpu_custom_call.1} parent=1 // pred_check_branch
      %43 = sbr.rel (0) target = $region21
    $region20: #{tpu_custom_call.1} parent=1 // pred_region
      %45 = dma.done [#allocation4], 2048
    $region21: #{tpu_custom_call.1} parent=1 // pred_fallthru
      _
    // Predicated region
    $region22: #{tpu_custom_call.1} parent=1 // pred_check
      _
    $region23: #{tpu_custom_call.1} parent=1 // pred_check_branch
      %47 = sbr.rel (0) target = $region25
    $region24: #{tpu_custom_call.1} parent=1 // pred_region
      %49 = dma.done [#allocation7], 2048
    $region25: #{tpu_custom_call.1} parent=1 // pred_fallthru
      _
    %p50 = scmp.eq.s32.totalorder 0, 0
    // Predicated region
    $region26: #{tpu_custom_call.1} parent=1 // pred_check
      %p51 = pneg %p50
    $region27: #{tpu_custom_call.1} parent=1 // pred_check_branch
      %53 = sbr.rel (%p51) target = $region29
    $region28: #{tpu_custom_call.1} parent=1 // pred_region
      %54 = vst [vmem:[#allocation2] sm:$0xff] 0.0
      %55 = vst [vmem:[#allocation2 + $0x8] sm:$0xff] 0.0
      %56 = vst [vmem:[#allocation2 + $0x10] sm:$0xff] 0.0
      %57 = vst [vmem:[#allocation2 + $0x18] sm:$0xff] 0.0
      %58 = vst [vmem:[#allocation2 + $0x20] sm:$0xff] 0.0
      %59 = vst [vmem:[#allocation2 + $0x28] sm:$0xff] 0.0
      %60 = vst [vmem:[#allocation2 + $0x30] sm:$0xff] 0.0
      %61 = vst [vmem:[#allocation2 + $0x38] sm:$0xff] 0.0
      %62 = vst [vmem:[#allocation2 + $0x40] sm:$0xff] 0.0
      %63 = vst [vmem:[#allocation2 + $0x48] sm:$0xff] 0.0
      %64 = vst [vmem:[#allocation2 + $0x50] sm:$0xff] 0.0
      %65 = vst [vmem:[#allocation2 + $0x58] sm:$0xff] 0.0
      %66 = vst [vmem:[#allocation2 + $0x60] sm:$0xff] 0.0
      %67 = vst [vmem:[#allocation2 + $0x68] sm:$0xff] 0.0
      %68 = vst [vmem:[#allocation2 + $0x70] sm:$0xff] 0.0
      %69 = vst [vmem:[#allocation2 + $0x78] sm:$0xff] 0.0
    $region29: #{tpu_custom_call.1} parent=1 // pred_fallthru
      _
    %v70 = vld [vmem:[#allocation2] sm:$0xff]
    %v71 = vld [vmem:[#allocation2 + $0x8] sm:$0xff]
    %v72 = vld [vmem:[#allocation2 + $0x10] sm:$0xff]
    %v73 = vld [vmem:[#allocation2 + $0x18] sm:$0xff]
    %v74 = vld [vmem:[#allocation2 + $0x20] sm:$0xff]
    %v75 = vld [vmem:[#allocation2 + $0x28] sm:$0xff]
    %v76 = vld [vmem:[#allocation2 + $0x30] sm:$0xff]
    %v77 = vld [vmem:[#allocation2 + $0x38] sm:$0xff]
    %v78 = vld [vmem:[#allocation2 + $0x40] sm:$0xff]
    %v79 = vld [vmem:[#allocation2 + $0x48] sm:$0xff]
    %v80 = vld [vmem:[#allocation2 + $0x50] sm:$0xff]
    %v81 = vld [vmem:[#allocation2 + $0x58] sm:$0xff]
    %v82 = vld [vmem:[#allocation2 + $0x60] sm:$0xff]
    %v83 = vld [vmem:[#allocation2 + $0x68] sm:$0xff]
    %v84 = vld [vmem:[#allocation2 + $0x70] sm:$0xff]
    %v85 = vld [vmem:[#allocation2 + $0x78] sm:$0xff]
    %v86 = vld [vmem:[#allocation3] sm:$0xff]
    %v87 = vld [vmem:[#allocation3 + $0x8] sm:$0xff]
    %v88 = vld [vmem:[#allocation3 + $0x10] sm:$0xff]
    %v89 = vld [vmem:[#allocation3 + $0x18] sm:$0xff]
    %v90 = vld [vmem:[#allocation3 + $0x20] sm:$0xff]
    %v91 = vld [vmem:[#allocation3 + $0x28] sm:$0xff]
    %v92 = vld [vmem:[#allocation3 + $0x30] sm:$0xff]
    %v93 = vld [vmem:[#allocation3 + $0x38] sm:$0xff]
    %v94 = vld [vmem:[#allocation3 + $0x40] sm:$0xff]
    %v95 = vld [vmem:[#allocation3 + $0x48] sm:$0xff]
    %v96 = vld [vmem:[#allocation3 + $0x50] sm:$0xff]
    %v97 = vld [vmem:[#allocation3 + $0x58] sm:$0xff]
    %v98 = vld [vmem:[#allocation3 + $0x60] sm:$0xff]
    %v99 = vld [vmem:[#allocation3 + $0x68] sm:$0xff]
    %v100 = vld [vmem:[#allocation3 + $0x70] sm:$0xff]
    %v101 = vld [vmem:[#allocation3 + $0x78] sm:$0xff]
    %v102 = vld [vmem:[#allocation6] sm:$0xff]
    %v103 = vld [vmem:[#allocation6 + $0x8] sm:$0xff]
    %v104 = vld [vmem:[#allocation6 + $0x10] sm:$0xff]
    %v105 = vld [vmem:[#allocation6 + $0x18] sm:$0xff]
    %v106 = vld [vmem:[#allocation6 + $0x20] sm:$0xff]
    %v107 = vld [vmem:[#allocation6 + $0x28] sm:$0xff]
    %v108 = vld [vmem:[#allocation6 + $0x30] sm:$0xff]
    %v109 = vld [vmem:[#allocation6 + $0x38] sm:$0xff]
    %v110 = vld [vmem:[#allocation6 + $0x40] sm:$0xff]
    %v111 = vld [vmem:[#allocation6 + $0x48] sm:$0xff]
    %v112 = vld [vmem:[#allocation6 + $0x50] sm:$0xff]
    %v113 = vld [vmem:[#allocation6 + $0x58] sm:$0xff]
    %v114 = vld [vmem:[#allocation6 + $0x60] sm:$0xff]
    %v115 = vld [vmem:[#allocation6 + $0x68] sm:$0xff]
    %v116 = vld [vmem:[#allocation6 + $0x70] sm:$0xff]
    %v117 = vld [vmem:[#allocation6 + $0x78] sm:$0xff]
    %118 = vmatpush.msra.mxu0 %v117
    %119 = vmatpush.msra.mxu0 %v116
    %120 = vmatpush.msra.mxu0 %v115
    %121 = vmatpush.msra.mxu0 %v114
    %122 = vmatpush.msra.mxu0 %v113
    %123 = vmatpush.msra.mxu0 %v112
    %124 = vmatpush.msra.mxu0 %v111
    %125 = vmatpush.msra.mxu0 %v110
    %126 = vmatpush.msra.mxu0 %v109
    %127 = vmatpush.msra.mxu0 %v108
    %128 = vmatpush.msra.mxu0 %v107
    %129 = vmatpush.msra.mxu0 %v106
    %130 = vmatpush.msra.mxu0 %v105
    %131 = vmatpush.msra.mxu0 %v104
    %132 = vmatpush.msra.mxu0 %v103
    %133 = vmatpush.msra.mxu0 %v102
    %134 = vmatmul.f32.gmra.mxu0 %v86
    %v135 = vpop.f32.mrf.mxu0
    %v136 = vadd.f32 0.0, %v135
    %137 = vmatmul.f32.gmra.mxu0 %v87
    %v138 = vpop.f32.mrf.mxu0
    %v139 = vadd.f32 0.0, %v138
    %140 = vmatmul.f32.gmra.mxu0 %v88
    %v141 = vpop.f32.mrf.mxu0
    %v142 = vadd.f32 0.0, %v141
    %143 = vmatmul.f32.gmra.mxu0 %v89
    %v144 = vpop.f32.mrf.mxu0
    %v145 = vadd.f32 0.0, %v144
    %146 = vmatmul.f32.gmra.mxu0 %v90
    %v147 = vpop.f32.mrf.mxu0
    %v148 = vadd.f32 0.0, %v147
    %149 = vmatmul.f32.gmra.mxu0 %v91
    %v150 = vpop.f32.mrf.mxu0
    %v151 = vadd.f32 0.0, %v150
    %152 = vmatmul.f32.gmra.mxu0 %v92
    %v153 = vpop.f32.mrf.mxu0
    %v154 = vadd.f32 0.0, %v153
    %155 = vmatmul.f32.gmra.mxu0 %v93
    %v156 = vpop.f32.mrf.mxu0
    %v157 = vadd.f32 0.0, %v156
    %158 = vmatmul.f32.gmra.mxu0 %v94
    %v159 = vpop.f32.mrf.mxu0
    %v160 = vadd.f32 0.0, %v159
    %161 = vmatmul.f32.gmra.mxu0 %v95
    %v162 = vpop.f32.mrf.mxu0
    %v163 = vadd.f32 0.0, %v162
    %164 = vmatmul.f32.gmra.mxu0 %v96
    %v165 = vpop.f32.mrf.mxu0
    %v166 = vadd.f32 0.0, %v165
    %167 = vmatmul.f32.gmra.mxu0 %v97
    %v168 = vpop.f32.mrf.mxu0
    %v169 = vadd.f32 0.0, %v168
    %170 = vmatmul.f32.gmra.mxu0 %v98
    %v171 = vpop.f32.mrf.mxu0
    %v172 = vadd.f32 0.0, %v171
    %173 = vmatmul.f32.gmra.mxu0 %v99
    %v174 = vpop.f32.mrf.mxu0
    %v175 = vadd.f32 0.0, %v174
    %176 = vmatmul.f32.gmra.mxu0 %v100
    %v177 = vpop.f32.mrf.mxu0
    %v178 = vadd.f32 0.0, %v177
    %179 = vmatmul.f32.gmra.mxu0 %v101
    %v180 = vpop.f32.mrf.mxu0
    %v181 = vadd.f32 0.0, %v180
    %182 = vdwg.mxu0
    %v183 = vadd.f32 %v70, %v136
    %v184 = vadd.f32 %v71, %v139
    %v185 = vadd.f32 %v72, %v142
    %v186 = vadd.f32 %v73, %v145
    %v187 = vadd.f32 %v74, %v148
    %v188 = vadd.f32 %v75, %v151
    %v189 = vadd.f32 %v76, %v154
    %v190 = vadd.f32 %v77, %v157
    %v191 = vadd.f32 %v78, %v160
    %v192 = vadd.f32 %v79, %v163
    %v193 = vadd.f32 %v80, %v166
    %v194 = vadd.f32 %v81, %v169
    %v195 = vadd.f32 %v82, %v172
    %v196 = vadd.f32 %v83, %v175
    %v197 = vadd.f32 %v84, %v178
    %v198 = vadd.f32 %v85, %v181
    %199 = vst [vmem:[#allocation2] sm:$0xff] %v183
    %200 = vst [vmem:[#allocation2 + $0x8] sm:$0xff] %v184
    %201 = vst [vmem:[#allocation2 + $0x10] sm:$0xff] %v185
    %202 = vst [vmem:[#allocation2 + $0x18] sm:$0xff] %v186
    %203 = vst [vmem:[#allocation2 + $0x20] sm:$0xff] %v187
    %204 = vst [vmem:[#allocation2 + $0x28] sm:$0xff] %v188
    %205 = vst [vmem:[#allocation2 + $0x30] sm:$0xff] %v189
    %206 = vst [vmem:[#allocation2 + $0x38] sm:$0xff] %v190
    %207 = vst [vmem:[#allocation2 + $0x40] sm:$0xff] %v191
    %208 = vst [vmem:[#allocation2 + $0x48] sm:$0xff] %v192
    %209 = vst [vmem:[#allocation2 + $0x50] sm:$0xff] %v193
    %210 = vst [vmem:[#allocation2 + $0x58] sm:$0xff] %v194
    %211 = vst [vmem:[#allocation2 + $0x60] sm:$0xff] %v195
    %212 = vst [vmem:[#allocation2 + $0x68] sm:$0xff] %v196
    %213 = vst [vmem:[#allocation2 + $0x70] sm:$0xff] %v197
    %214 = vst [vmem:[#allocation2 + $0x78] sm:$0xff] %v198
    // Predicated region
    $region30: #{tpu_custom_call.1} parent=1 // pred_check
      %p215 = pneg %p50
    $region31: #{tpu_custom_call.1} parent=1 // pred_check_branch
      %217 = sbr.rel (%p215) target = $region33
    $region32: #{tpu_custom_call.1} parent=1 // pred_region
      %v218 = vld [vmem:[#allocation2] sm:$0xff]
      %v219 = vld [vmem:[#allocation2 + $0x8] sm:$0xff]
      %v220 = vld [vmem:[#allocation2 + $0x10] sm:$0xff]
      %v221 = vld [vmem:[#allocation2 + $0x18] sm:$0xff]
      %v222 = vld [vmem:[#allocation2 + $0x20] sm:$0xff]
      %v223 = vld [vmem:[#allocation2 + $0x28] sm:$0xff]
      %v224 = vld [vmem:[#allocation2 + $0x30] sm:$0xff]
      %v225 = vld [vmem:[#allocation2 + $0x38] sm:$0xff]
      %v226 = vld [vmem:[#allocation2 + $0x40] sm:$0xff]
      %v227 = vld [vmem:[#allocation2 + $0x48] sm:$0xff]
      %v228 = vld [vmem:[#allocation2 + $0x50] sm:$0xff]
      %v229 = vld [vmem:[#allocation2 + $0x58] sm:$0xff]
      %v230 = vld [vmem:[#allocation2 + $0x60] sm:$0xff]
      %v231 = vld [vmem:[#allocation2 + $0x68] sm:$0xff]
      %v232 = vld [vmem:[#allocation2 + $0x70] sm:$0xff]
      %v233 = vld [vmem:[#allocation2 + $0x78] sm:$0xff]
      %v234 = vld [vmem:[%s2] sm:$0x1]
      %v236 = vperm.slane %v234, 0
      %v238 = vmul.f32 %v218, %v236
      %v239 = vmul.f32 %v219, %v236
      %v240 = vmul.f32 %v220, %v236
      %v241 = vmul.f32 %v221, %v236
      %v242 = vmul.f32 %v222, %v236
      %v243 = vmul.f32 %v223, %v236
      %v244 = vmul.f32 %v224, %v236
      %v245 = vmul.f32 %v225, %v236
      %v246 = vmul.f32 %v226, %v236
      %v247 = vmul.f32 %v227, %v236
      %v248 = vmul.f32 %v228, %v236
      %v249 = vmul.f32 %v229, %v236
      %v250 = vmul.f32 %v230, %v236
      %v251 = vmul.f32 %v231, %v236
      %v252 = vmul.f32 %v232, %v236
      %v253 = vmul.f32 %v233, %v236
      %v254 = vld [vmem:[%s3] sm:$0x1]
      %v256 = vperm.slane %v254, 0
      %v258 = vadd.f32 %v238, %v256
      %v259 = vadd.f32 %v239, %v256
      %v260 = vadd.f32 %v240, %v256
      %v261 = vadd.f32 %v241, %v256
      %v262 = vadd.f32 %v242, %v256
      %v263 = vadd.f32 %v243, %v256
      %v264 = vadd.f32 %v244, %v256
      %v265 = vadd.f32 %v245, %v256
      %v266 = vadd.f32 %v246, %v256
      %v267 = vadd.f32 %v247, %v256
      %v268 = vadd.f32 %v248, %v256
      %v269 = vadd.f32 %v249, %v256
      %v270 = vadd.f32 %v250, %v256
      %v271 = vadd.f32 %v251, %v256
      %v272 = vadd.f32 %v252, %v256
      %v273 = vadd.f32 %v253, %v256
      %v274 = vmax.f32 %v258, 0.0
      %v275 = vmax.f32 %v259, 0.0
      %v276 = vmax.f32 %v260, 0.0
      %v277 = vmax.f32 %v261, 0.0
      %v278 = vmax.f32 %v262, 0.0
      %v279 = vmax.f32 %v263, 0.0
      %v280 = vmax.f32 %v264, 0.0
      %v281 = vmax.f32 %v265, 0.0
      %v282 = vmax.f32 %v266, 0.0
      %v283 = vmax.f32 %v267, 0.0
      %v284 = vmax.f32 %v268, 0.0
      %v285 = vmax.f32 %v269, 0.0
      %v286 = vmax.f32 %v270, 0.0
      %v287 = vmax.f32 %v271, 0.0
      %v288 = vmax.f32 %v272, 0.0
      %v289 = vmax.f32 %v273, 0.0
      %290 = vst [vmem:[#allocation8] sm:$0xff] %v274
      %291 = vst [vmem:[#allocation8 + $0x8] sm:$0xff] %v275
      %292 = vst [vmem:[#allocation8 + $0x10] sm:$0xff] %v276
      %293 = vst [vmem:[#allocation8 + $0x18] sm:$0xff] %v277
      %294 = vst [vmem:[#allocation8 + $0x20] sm:$0xff] %v278
      %295 = vst [vmem:[#allocation8 + $0x28] sm:$0xff] %v279
      %296 = vst [vmem:[#allocation8 + $0x30] sm:$0xff] %v280
      %297 = vst [vmem:[#allocation8 + $0x38] sm:$0xff] %v281
      %298 = vst [vmem:[#allocation8 + $0x40] sm:$0xff] %v282
      %299 = vst [vmem:[#allocation8 + $0x48] sm:$0xff] %v283
      %300 = vst [vmem:[#allocation8 + $0x50] sm:$0xff] %v284
      %301 = vst [vmem:[#allocation8 + $0x58] sm:$0xff] %v285
      %302 = vst [vmem:[#allocation8 + $0x60] sm:$0xff] %v286
      %303 = vst [vmem:[#allocation8 + $0x68] sm:$0xff] %v287
      %304 = vst [vmem:[#allocation8 + $0x70] sm:$0xff] %v288
      %305 = vst [vmem:[#allocation8 + $0x78] sm:$0xff] %v289
    $region33: #{tpu_custom_call.1} parent=1 // pred_fallthru
      _
    // Predicated region
    $region34: #{tpu_custom_call.1} parent=1 // pred_check
      _
    $region35: #{tpu_custom_call.1} parent=1 // pred_check_branch
      %307 = sbr.rel (0) target = $region37
    $region36: #{tpu_custom_call.1} parent=1 // pred_region
      %309 = vsyncadd [#allocation5], 0
      %s310 = sshll.u32 [#allocation8], 4
      %s311 = int_to_ptr.vmem [resolvable:$true] %s310
      %s312 = sshll.u32 %s4, 4
      %s313 = int_to_ptr.hbm [resolvable:$true] %s312
      %318 = dma.vmem_to_hbm [thread:$0]  %s311, 2048, %s313, [#allocation5], 128, 128, 8
    $region37: #{tpu_custom_call.1} parent=1 // pred_fallthru
      _
    // Predicated region
    $region38: #{tpu_custom_call.1} parent=1 // pred_check
      _
    $region39: #{tpu_custom_call.1} parent=1 // pred_check_branch
      %320 = sbr.rel (0) target = $region41
    $region40: #{tpu_custom_call.1} parent=1 // pred_region
      %322 = dma.done [#allocation5], 2048
    $region41: #{tpu_custom_call.1} parent=1 // pred_fallthru
      _
    %323 = vsyncpa [#allocation4], 1
    %324 = vsyncpa [#allocation7], 1
    %325 = vsyncpa [#allocation5], 1

</llo_original>
